<compile_context>
chip_gen: v6e
topology: v6e:2x2x1
jax: 0.10.0
libtpu: 0.0.40
codegen_flags: <defaults>
</compile_context>

<pallas_src>
import jax
import jax.numpy as jnp
from jax import lax
from jax.experimental import pallas as pl
from jax.experimental.pallas import tpu as pltpu


_SENTINEL = 1.0e15   # (1e15)^2 * D stays far below f32 max; dominates any real coord
_TN_MAX = 1024       # source-point tile (sublane axis)
_TM_MAX = 2048       # target-point tile (lane axis); TM/128 <= 16 keeps col-min carry small
_CHUNK = 8           # source rows processed per fused inner-loop step (one sublane group)


def _round_up(x: int, m: int) -> int:
    return ((x + m - 1) // m) * m


def chamfer_kernel(xc_ref, xt_ref, partc_ref, partt_ref):
    """Grid point (i, j): fused squared-distance + min reductions between
    source tile i and target tile j. The full (TN, TM) distance tile is never
    materialized; only a (CHUNK, TM) slab lives in vregs at any time.

    xc_ref:    VMEM (TN, D)      source points (points on sublanes, coords on lanes)
    xt_ref:    VMEM (D, TM)      target points, transposed (points on lanes)
    partc_ref: VMEM (1, TN, 1)   per-(i, j) row-min partials (min over this tile's targets)
    partt_ref: VMEM (1, 1, TM)   per-(i, j) col-min partials (min over this tile's sources)
    """
    tn, d = xc_ref.shape
    tm = xt_ref.shape[1]
    num_chunks = tn // _CHUNK

    def body(c, col_min):
        start = pl.multiple_of(c * _CHUNK, _CHUNK)
        xc_c = xc_ref[pl.ds(start, _CHUNK), :]                 # (C, D)
        # Exact direct-diff squared distances; static unroll over D (=2) coords.
        dists = None
        for k in range(d):
            diff = xc_c[:, k:k + 1] - xt_ref[k:k + 1, :]       # (C, 1) - (1, TM) -> (C, TM)
            sq = diff * diff
            dists = sq if dists is None else dists + sq
        # Row mins for this chunk (min over the TM targets of this tile).
        row_min = jnp.min(dists, axis=1, keepdims=True)        # (C, 1)
        partc_ref[:, pl.ds(start, _CHUNK), :] = row_min[None]  # (1, C, 1) masked store
        # Running column-min, carried in vregs across chunks.
        return jnp.minimum(col_min, jnp.min(dists, axis=0, keepdims=True))

    col_min0 = jnp.full((1, tm), jnp.inf, dtype=jnp.float32)
    unroll = 2 if (num_chunks > 1 and num_chunks % 2 == 0) else 1
    col_min = lax.fori_loop(0, num_chunks, body, col_min0, unroll=unroll)
    partt_ref[...] = col_min[None]                              # (1, 1, TM) lane-dense store


@jax.jit
def chamfer_loss(xc: jax.Array, xt: jax.Array) -> jax.Array:
    """Chamfer distance between point sets Xc (N, D) and Xt (M, D). Returns scalar f32."""
    n, d = xc.shape
    m, d2 = xt.shape
    assert d == d2
    assert n > 0 and m > 0  # empty point sets are undefined (matches torch erroring)

    tn = min(_TN_MAX, _round_up(n, _CHUNK))
    tm = min(_TM_MAX, _round_up(m, 128))
    npad = _round_up(n, tn)
    mpad = _round_up(m, tm)
    n_tiles = npad // tn
    m_tiles = mpad // tm

    # Sentinel-pad invalid points: they can never win a min against real points,
    # and padded rows/cols are sliced off before the means below.
    xc_p = jnp.full((npad, d), _SENTINEL, jnp.float32).at[:n, :].set(
        xc.astype(jnp.float32))
    xt_p = jnp.full((d, mpad), _SENTINEL, jnp.float32).at[:, :m].set(
        xt.astype(jnp.float32).T)

    # TODO(synk): for very large clouds, emit partials along whichever axis has
    # fewer tiles (or add a second tiny pass) to bound the partials' HBM footprint.
    part_c, part_t = pl.pallas_call(
        chamfer_kernel,
        out_shape=(
            jax.ShapeDtypeStruct((m_tiles, npad, 1), jnp.float32),
            jax.ShapeDtypeStruct((n_tiles, 1, mpad), jnp.float32),
        ),
        grid=(n_tiles, m_tiles),
        in_specs=[
            pl.BlockSpec((tn, d), lambda i, j: (i, 0)),
            pl.BlockSpec((d, tm), lambda i, j: (0, j)),
        ],
        out_specs=(
            pl.BlockSpec((1, tn, 1), lambda i, j: (j, i, 0)),
            pl.BlockSpec((1, 1, tm), lambda i, j: (i, 0, j)),
        ),
        compiler_params=pltpu.CompilerParams(
            # Every output block is written exactly once by exactly one grid point,
            # so both axes are independent -> both TensorCores usable on v7x.
            dimension_semantics=("parallel", "parallel"),
            vmem_limit_bytes=32 * 1024 * 1024,
        ),
    )(xc_p, xt_p)

    # O(N*m_tiles + M*n_tiles) finalization in plain JAX (true sizes are static here).
    term_c = jnp.mean(jnp.min(part_c[:, :, 0], axis=0)[:n])
    term_t = jnp.mean(jnp.min(part_t[:, 0, :], axis=0)[:m])
    return term_c + term_t


def chamfer_loss_ref(xc, xt):
    """Pure-JAX reference matching torch.cdist(...)**2 + min/mean semantics."""
    diff = xc[:, None, :] - xt[None, :, :]
    dists = jnp.sum(diff * diff, axis=-1)
    return jnp.mean(jnp.min(dists, axis=1)) + jnp.mean(jnp.min(dists, axis=0))


if __name__ == "__main__":
    key = jax.random.PRNGKey(0)
    k1, k2, k3, k4 = jax.random.split(key, 4)

    # Small shapes matching the module docstring: Xc (N, 2), Xt (M, 2), N != M.
    Xc = jax.random.normal(k1, (10, 2), dtype=jnp.float32)
    Xt = jax.random.normal(k2, (15, 2), dtype=jnp.float32)
    loss = chamfer_loss(Xc, Xt)
    jax.block_until_ready(loss)
    ref = chamfer_loss_ref(Xc, Xt)
    assert jnp.allclose(loss, ref, rtol=1e-5, atol=1e-6), (loss, ref)

    # Larger case exercising a true 2x2 multi-tile grid (row-min and col-min
    # partials combined across tiles in the wrapper).
    Xc2 = jax.random.normal(k3, (1200, 2), dtype=jnp.float32)
    Xt2 = jax.random.normal(k4, (2200, 2), dtype=jnp.float32)
    loss2 = chamfer_loss(Xc2, Xt2)
    jax.block_until_ready(loss2)
    ref2 = chamfer_loss_ref(Xc2, Xt2)
    assert jnp.allclose(loss2, ref2, rtol=1e-5, atol=1e-6), (loss2, ref2)

    # TODO(synk): backward (grad) pass is left to torch/JAX autodiff; not implemented here.
    print("KERNEL_OK")
</pallas_src>

<mosaic_0001>
module attributes {stable_mosaic.version = 11 : i64} {
  func.func @chamfer_kernel(%arg0: i32, %arg1: i32, %arg2: memref<16x2xf32, #tpu.memory_space<vmem>>, %arg3: memref<2x128xf32, #tpu.memory_space<vmem>>, %arg4: memref<1x16x1xf32, #tpu.memory_space<vmem>>, %arg5: memref<1x1x128xf32, #tpu.memory_space<vmem>>) attributes {dimension_semantics = [#tpu.dimension_semantics<parallel>, #tpu.dimension_semantics<parallel>], iteration_bounds = array<i64: 1, 1>, scalar_prefetch = 0 : i64, scratch_operands = 0 : i64, tpu.core_type = #tpu.core_type<tc>, window_params = [{transform_indices = @transform_0, window_bounds = array<i64: 16, 2>}, {transform_indices = @transform_1, window_bounds = array<i64: 2, 128>}, {transform_indices = @transform_2, window_bounds = array<i64: 1, 16, 1>}, {transform_indices = @transform_3, window_bounds = array<i64: 1, 1, 128>}]} {
    %cst = arith.constant 0x7F800000 : f32
    %0 = vector.broadcast %cst : f32 to vector<1x128xf32>
    %c0_i32 = arith.constant 0 : i32
    %c8_i32 = arith.constant 8 : i32
    %1 = arith.muli %c0_i32, %c8_i32 : i32
    %2 = tpu.assume_multiple %1, 8 : i32
    %3 = arith.index_cast %2 : i32 to index
    %c0 = arith.constant 0 : index
    %4 = vector.load %arg2[%3, %c0] : memref<16x2xf32, #tpu.memory_space<vmem>>, vector<8x2xf32>
    %5 = vector.extract_strided_slice %4 {offsets = [0, 0], sizes = [8, 1], strides = [1, 1]} : vector<8x2xf32> to vector<8x1xf32>
    %c0_0 = arith.constant 0 : index
    %c0_1 = arith.constant 0 : index
    %6 = vector.load %arg3[%c0_0, %c0_1] : memref<2x128xf32, #tpu.memory_space<vmem>>, vector<1x128xf32>
    %7 = vector.broadcast %5 : vector<8x1xf32> to vector<8x128xf32>
    %8 = vector.broadcast %6 : vector<1x128xf32> to vector<8x128xf32>
    %9 = arith.subf %7, %8 : vector<8x128xf32>
    %10 = arith.mulf %9, %9 : vector<8x128xf32>
    %11 = vector.extract_strided_slice %4 {offsets = [0, 1], sizes = [8, 1], strides = [1, 1]} : vector<8x2xf32> to vector<8x1xf32>
    %c1 = arith.constant 1 : index
    %c0_2 = arith.constant 0 : index
    %12 = vector.load %arg3[%c1, %c0_2] : memref<2x128xf32, #tpu.memory_space<vmem>>, vector<1x128xf32>
    %13 = vector.broadcast %11 : vector<8x1xf32> to vector<8x128xf32>
    %14 = vector.broadcast %12 : vector<1x128xf32> to vector<8x128xf32>
    %15 = arith.subf %13, %14 : vector<8x128xf32>
    %16 = arith.mulf %15, %15 : vector<8x128xf32>
    %17 = arith.addf %10, %16 : vector<8x128xf32>
    %cst_3 = arith.constant dense<0x7F800000> : vector<8xf32>
    %18 = vector.multi_reduction <minimumf>, %17, %cst_3 [1] : vector<8x128xf32> to vector<8xf32>
    %19 = vector.shape_cast %18 : vector<8xf32> to vector<8x1xf32>
    %20 = vector.shape_cast %19 : vector<8x1xf32> to vector<1x8x1xf32>
    %c0_4 = arith.constant 0 : index
    %21 = arith.index_cast %2 : i32 to index
    %c0_5 = arith.constant 0 : index
    %22 = vector.load %arg4[%c0_4, %21, %c0_5] : memref<1x16x1xf32, #tpu.memory_space<vmem>>, vector<1x8x1xf32>
    tpu.vector_store %arg4[%c0_4, %21, %c0_5], %20 {strides = array<i32>} : memref<1x16x1xf32, #tpu.memory_space<vmem>>, vector<1x8x1xf32>,
    %cst_6 = arith.constant dense<0x7F800000> : vector<128xf32>
    %23 = vector.multi_reduction <minimumf>, %17, %cst_6 [0] : vector<8x128xf32> to vector<128xf32>
    %24 = vector.shape_cast %23 : vector<128xf32> to vector<1x128xf32>
    %25 = arith.minimumf %0, %24 : vector<1x128xf32>
    %c1_i32 = arith.constant 1 : i32
    %c8_i32_7 = arith.constant 8 : i32
    %26 = arith.muli %c1_i32, %c8_i32_7 : i32
    %27 = tpu.assume_multiple %26, 8 : i32
    %28 = arith.index_cast %27 : i32 to index
    %c0_8 = arith.constant 0 : index
    %29 = vector.load %arg2[%28, %c0_8] : memref<16x2xf32, #tpu.memory_space<vmem>>, vector<8x2xf32>
    %30 = vector.extract_strided_slice %29 {offsets = [0, 0], sizes = [8, 1], strides = [1, 1]} : vector<8x2xf32> to vector<8x1xf32>
    %c0_9 = arith.constant 0 : index
    %c0_10 = arith.constant 0 : index
    %31 = vector.load %arg3[%c0_9, %c0_10] : memref<2x128xf32, #tpu.memory_space<vmem>>, vector<1x128xf32>
    %32 = vector.broadcast %30 : vector<8x1xf32> to vector<8x128xf32>
    %33 = vector.broadcast %31 : vector<1x128xf32> to vector<8x128xf32>
    %34 = arith.subf %32, %33 : vector<8x128xf32>
    %35 = arith.mulf %34, %34 : vector<8x128xf32>
    %36 = vector.extract_strided_slice %29 {offsets = [0, 1], sizes = [8, 1], strides = [1, 1]} : vector<8x2xf32> to vector<8x1xf32>
    %c1_11 = arith.constant 1 : index
    %c0_12 = arith.constant 0 : index
    %37 = vector.load %arg3[%c1_11, %c0_12] : memref<2x128xf32, #tpu.memory_space<vmem>>, vector<1x128xf32>
    %38 = vector.broadcast %36 : vector<8x1xf32> to vector<8x128xf32>
    %39 = vector.broadcast %37 : vector<1x128xf32> to vector<8x128xf32>
    %40 = arith.subf %38, %39 : vector<8x128xf32>
    %41 = arith.mulf %40, %40 : vector<8x128xf32>
    %42 = arith.addf %35, %41 : vector<8x128xf32>
    %cst_13 = arith.constant dense<0x7F800000> : vector<8xf32>
    %43 = vector.multi_reduction <minimumf>, %42, %cst_13 [1] : vector<8x128xf32> to vector<8xf32>
    %44 = vector.shape_cast %43 : vector<8xf32> to vector<8x1xf32>
    %45 = vector.shape_cast %44 : vector<8x1xf32> to vector<1x8x1xf32>
    %c0_14 = arith.constant 0 : index
    %46 = arith.index_cast %27 : i32 to index
    %c0_15 = arith.constant 0 : index
    %47 = vector.load %arg4[%c0_14, %46, %c0_15] : memref<1x16x1xf32, #tpu.memory_space<vmem>>, vector<1x8x1xf32>
    tpu.vector_store %arg4[%c0_14, %46, %c0_15], %45 {strides = array<i32>} : memref<1x16x1xf32, #tpu.memory_space<vmem>>, vector<1x8x1xf32>,
    %cst_16 = arith.constant dense<0x7F800000> : vector<128xf32>
    %48 = vector.multi_reduction <minimumf>, %42, %cst_16 [0] : vector<8x128xf32> to vector<128xf32>
    %49 = vector.shape_cast %48 : vector<128xf32> to vector<1x128xf32>
    %50 = arith.minimumf %25, %49 : vector<1x128xf32>
    %c2_i32 = arith.constant 2 : i32
    %51 = vector.shape_cast %50 : vector<1x128xf32> to vector<1x1x128xf32>
    %c0_17 = arith.constant 0 : index
    %c0_18 = arith.constant 0 : index
    %c0_19 = arith.constant 0 : index
    %52 = vector.load %arg5[%c0_17, %c0_18, %c0_19] : memref<1x1x128xf32, #tpu.memory_space<vmem>>, vector<1x1x128xf32>
    tpu.vector_store %arg5[%c0_17, %c0_18, %c0_19], %51 {strides = array<i32>} : memref<1x1x128xf32, #tpu.memory_space<vmem>>, vector<1x1x128xf32>,
    return
  }
  func.func @transform_0(%arg0: i32, %arg1: i32) -> (i32, i32) {
    %c0_i32 = arith.constant 0 : i32
    %c0_i32_0 = arith.constant 0 : i32
    return %arg0, %c0_i32 : i32, i32
  }
  func.func @transform_1(%arg0: i32, %arg1: i32) -> (i32, i32) {
    %c0_i32 = arith.constant 0 : i32
    %c0_i32_0 = arith.constant 0 : i32
    return %c0_i32, %arg1 : i32, i32
  }
  func.func @transform_2(%arg0: i32, %arg1: i32) -> (i32, i32, i32) {
    %c0_i32 = arith.constant 0 : i32
    %c0_i32_0 = arith.constant 0 : i32
    return %arg1, %arg0, %c0_i32 : i32, i32, i32
  }
  func.func @transform_3(%arg0: i32, %arg1: i32) -> (i32, i32, i32) {
    %c0_i32 = arith.constant 0 : i32
    %c0_i32_0 = arith.constant 0 : i32
    return %arg0, %c0_i32, %arg1 : i32, i32, i32
  }
}

</mosaic_0001>

<llo_original>
// kernel: chamfer_loss.1
$region0: #{chamfer_loss.1}
  #allocation0 [shape = 'u32[]', space=smem, size = 0x4, offset = 0x4, fixed_abs, tag = 'smem constant byte address 0x4 - core index']
  #allocation1 [shape = 'u32[144,128]{1,0:T(1,128)}', space=vmem, size = 0x12000, scoped, tag = 'internal scratch']
  %s0 = inlined_call_operand.vmem [shape: f32[16,2], index: 0, kind: input, shape index: {}]
  %s1 = inlined_call_operand.vmem [shape: f32[2,128], index: 1, kind: input, shape index: {}]
  %s2 = inlined_call_operand.vmem [shape: f32[1,16,1], index: 2, kind: output, shape index: {0}]
  %s3 = inlined_call_operand.vmem [shape: f32[1,1,128], index: 3, kind: output, shape index: {1}]
  %4 = xla_tuple %s2, %s3
  %s5 = sld [smem:[#allocation0]]
  $region26: #{chamfer_loss.1} parent=0
    _
  %s7 = ssub.s32 1, %s5
  %s8 = scalar_select 0, %s7, %s5
  // Predicated region
  $region2: #{chamfer_loss.1} parent=0 // pred_check
    _
  $region3: #{chamfer_loss.1} parent=0 // pred_check_branch
    %10 = sbr.rel (0) target = $region5
  $region4: #{chamfer_loss.1} parent=0 // pred_region
    _
  $region5: #{chamfer_loss.1} parent=0 // pred_fallthru
    _
  // Predicated region
  $region6: #{chamfer_loss.1} parent=0 // pred_check
    _
  $region7: #{chamfer_loss.1} parent=0 // pred_check_branch
    %12 = sbr.rel (0) target = $region9
  $region8: #{chamfer_loss.1} parent=0 // pred_region
    _
  $region9: #{chamfer_loss.1} parent=0 // pred_fallthru
    _
  %v13 = vld [vmem:[%s0] sm:$0xff]
  %v14 = vld [vmem:[%s1] sm:$0x1]
  %16 = vset.pattern.permute.xlu0 0
  %17 = vperm.xlu0 %16, %v13
  %v18 = vpop.permute.xlu0 %17
  %v20 = vlaneseq
  %v21 = vshrl.u32 %v20, 7
  %v22 = vsub.s32 0, %v21
  %v23 = vrot.slane %v14, %v22
  %v24 = vsub.f32 %v18, %v23
  %v25 = vmul.f32 %v24, %v24
  %v26 = vld [vmem:[%s1 + $0x1] sm:$0x1]
  %27 = vset.pattern.permute.xlu0 1
  %28 = vperm.xlu0 %27, %v13
  %v29 = vpop.permute.xlu0 %28
  %v31 = vlaneseq
  %v32 = vshrl.u32 %v31, 7
  %v33 = vsub.s32 0, %v32
  %v34 = vrot.slane %v26, %v33
  %v35 = vsub.f32 %v29, %v34
  %v36 = vmul.f32 %v35, %v35
  %v37 = vadd.f32 %v25, %v36
  %38 = vmin.xlane.f32.xlu0 %v37
  %v39 = vpop.xlane.xlu0 %38
  %vm40 = vcmask 7168
  %41 = vst.msk [vmem:[%s2] sm:$0xff] %vm40, %v39
  %v42 = vrot.slane %v37, 4
  %v43 = vmin.f32 %v37, %v42
  %v44 = vrot.slane %v43, 2
  %v45 = vmin.f32 %v43, %v44
  %v46 = vrot.slane %v45, 1
  %v47 = vmin.f32 %v45, %v46
  %s48 = scalar_lea.vmem %s0, 8
  %v49 = vld [vmem:[%s48] sm:$0xff]
  %v50 = vld [vmem:[%s1] sm:$0x1]
  %52 = vset.pattern.permute.xlu0 0
  %53 = vperm.xlu0 %52, %v49
  %v54 = vpop.permute.xlu0 %53
  %v56 = vlaneseq
  %v57 = vshrl.u32 %v56, 7
  %v58 = vsub.s32 0, %v57
  %v59 = vrot.slane %v50, %v58
  %v60 = vsub.f32 %v54, %v59
  %v61 = vmul.f32 %v60, %v60
  %v62 = vld [vmem:[%s1 + $0x1] sm:$0x1]
  %63 = vset.pattern.permute.xlu0 1
  %64 = vperm.xlu0 %63, %v49
  %v65 = vpop.permute.xlu0 %64
  %v67 = vlaneseq
  %v68 = vshrl.u32 %v67, 7
  %v69 = vsub.s32 0, %v68
  %v70 = vrot.slane %v62, %v69
  %v71 = vsub.f32 %v65, %v70
  %v72 = vmul.f32 %v71, %v71
  %v73 = vadd.f32 %v61, %v72
  %74 = vmin.xlane.f32.xlu0 %v73
  %v75 = vpop.xlane.xlu0 %74
  %s76 = scalar_lea.vmem %s2, 8
  %77 = vst.msk [vmem:[%s76] sm:$0xff] %vm40, %v75
  %v78 = vrot.slane %v73, 4
  %v79 = vmin.f32 %v73, %v78
  %v80 = vrot.slane %v79, 2
  %v81 = vmin.f32 %v79, %v80
  %v82 = vrot.slane %v81, 1
  %v83 = vmin.f32 %v81, %v82
  %v84 = vmin.f32 %v47, %v83
  %85 = vst [vmem:[%s3] sm:$0x1] %v84
  // Predicated region
  $region10: #{chamfer_loss.1} parent=0 // pred_check
    _
  $region11: #{chamfer_loss.1} parent=0 // pred_check_branch
    %87 = sbr.rel (0) target = $region13
  $region12: #{chamfer_loss.1} parent=0 // pred_region
    _
  $region13: #{chamfer_loss.1} parent=0 // pred_fallthru
    _
  // Predicated region
  $region14: #{chamfer_loss.1} parent=0 // pred_check
    _
  $region15: #{chamfer_loss.1} parent=0 // pred_check_branch
    %89 = sbr.rel (0) target = $region17
  $region16: #{chamfer_loss.1} parent=0 // pred_region
    _
  $region17: #{chamfer_loss.1} parent=0 // pred_fallthru
    _
  // Predicated region
  $region18: #{chamfer_loss.1} parent=0 // pred_check
    _
  $region19: #{chamfer_loss.1} parent=0 // pred_check_branch
    %91 = sbr.rel (0) target = $region21
  $region20: #{chamfer_loss.1} parent=0 // pred_region
    _
  $region21: #{chamfer_loss.1} parent=0 // pred_fallthru
    _
  // Predicated region
  $region22: #{chamfer_loss.1} parent=0 // pred_check
    _
  $region23: #{chamfer_loss.1} parent=0 // pred_check_branch
    %93 = sbr.rel (0) target = $region25
  $region24: #{chamfer_loss.1} parent=0 // pred_region
    _
  $region25: #{chamfer_loss.1} parent=0 // pred_fallthru
    _

</llo_original>
